<compile_context>
chip_gen: v7x
topology: tpu7x:2x2x1
jax: 0.10.0
libtpu: 0.0.40
codegen_flags: <defaults>
</compile_context>

<pallas_src>
import jax
import jax.numpy as jnp
from jax import lax
from jax.experimental import pallas as pl
from jax.experimental.pallas import tpu as pltpu


class Config:
    def __init__(self, batchs):
        self.batchs = batchs


_LANE = 128
# Per-input, per-pipeline-buffer DMA chunk target (bytes).
_TARGET_CHUNK_BYTES = 4 * 1024 * 1024
# 2 inputs x 2 pipeline buffers x 4 MiB = 16 MiB; raise the scoped-VMEM limit
# explicitly so the larger chunks are safe on v5e's 16 MiB default as well.
_VMEM_LIMIT_BYTES = 32 * 1024 * 1024


def _make_kernel(rows, chunk_rows, chunks_per_split, mask_tail):
    """Grid = (batch_block, split, chunk).  Accumulates lane-dense per-batch
    partial sums of (true + false) and (true * false) directly into the
    revisited VMEM output blocks."""

    def kernel(t_ref, f_ref, den_ref, num_ref):
        p = pl.program_id(1)
        k = pl.program_id(2)

        t = t_ref[...]          # (bb, chunk_rows, 128)
        f = f_ref[...]
        if t.dtype != jnp.float32:   # accept bf16 masks; accumulate in f32
            t = t.astype(jnp.float32)
            f = f.astype(jnp.float32)

        if mask_tail:
            # Logical chunk index (the DMA index is clamped in the index_map;
            # masking is driven by the *logical* index so clamped re-reads and
            # the partial trailing chunk both contribute exactly zero).
            kk = p * chunks_per_split + k
            row_idx = lax.broadcasted_iota(jnp.int32, (chunk_rows, _LANE), 0)
            valid = (kk * chunk_rows + row_idx) < rows
            t = jnp.where(valid, t, 0.0)
            f = jnp.where(valid, f, 0.0)

        # Fused denominator reduction: sum(t + f), not sum(t) + sum(f).
        # Reduce only over the sublane/row axis -> lane-dense (bb, 128)
        # partials; the cross-lane reduce happens once, in JAX, at the end.
        den_part = jnp.sum(t + f, axis=1)   # (bb, 128)
        num_part = jnp.sum(t * f, axis=1)   # (bb, 128)

        @pl.when(k == 0)
        def _():
            den_ref[0, 0] = den_part
            num_ref[0, 0] = num_part

        @pl.when(k > 0)
        def _():
            den_ref[0, 0] += den_part
            num_ref[0, 0] += num_part

    return kernel


def ios_loss(true, false, config):
    """Pallas implementation of IosLoss.forward(true, false)."""
    assert true.shape == false.shape
    B = true.shape[0]
    n_elems = 1
    for d in true.shape[1:]:
        n_elems *= d

    itemsize = jnp.dtype(true.dtype).itemsize

    t = true.reshape(B, n_elems)
    f = false.reshape(B, n_elems)

    # Lane-dense layout: rows of 128.  Only pad to the 128-lane boundary when
    # strictly required (at most 127 zeros per batch; exact for both sums).
    # TODO(synk): the misaligned case still materializes one copy of each
    # input via jnp.pad; a manual-DMA tail path could avoid even that.
    lane_pad = (-n_elems) % _LANE
    if lane_pad:
        t = jnp.pad(t, ((0, 0), (0, lane_pad)))
        f = jnp.pad(f, ((0, 0), (0, lane_pad)))
    rows = (n_elems + lane_pad) // _LANE
    t = t.reshape(B, rows, _LANE)
    f = f.reshape(B, rows, _LANE)

    # ---- Tiling selection (byte-budgeted, so bf16 automatically gets 2x the
    # rows per chunk for the same DMA-step granularity). ----
    per_row_bytes = _LANE * itemsize
    sublane = max(1, 32 // itemsize)                 # VMEM sublane tile: 8 f32 / 16 bf16
    rows_tiled = -(-rows // sublane) * sublane       # conservative VMEM footprint
    batch_buf_bytes = rows_tiled * per_row_bytes

    if batch_buf_bytes <= _TARGET_CHUNK_BYTES:
        # Small per-batch slab: fold several batches per grid step.
        bb = min(B, _TARGET_CHUNK_BYTES // batch_buf_bytes)
        chunk_rows = rows            # equals full dim -> always a legal block
        n_chunks = 1
    else:
        bb = 1
        chunk_rows = (_TARGET_CHUNK_BYTES // per_row_bytes) // sublane * sublane
        n_chunks = -(-rows // chunk_rows)

    n_bb = -(-B // bb)

    # v7x megacore: if the parallel batch-block axis alone is odd (esp. == 1),
    # split the chunk range across a second parallel axis of size 2 so both
    # TensorCores get work.  No effect on v5e/v6e (single TC) beyond grid shape.
    n_split = 2 if (n_bb % 2 == 1 and n_chunks >= 2) else 1
    chunks_per_split = -(-n_chunks // n_split)
    mask_tail = (n_split * chunks_per_split * chunk_rows) > rows

    kernel = _make_kernel(rows, chunk_rows, chunks_per_split, mask_tail)

    def in_map(b, p, k):
        # Clamp the DMA chunk index; duplicate reads past the end are zeroed
        # by the in-kernel mask (driven by the logical, unclamped index).
        return (b, jnp.minimum(p * chunks_per_split + k, n_chunks - 1), 0)

    def out_map(b, p, k):
        return (b, p, 0, 0)          # revisited across k -> VMEM accumulator

    out_sds = jax.ShapeDtypeStruct((n_bb, n_split, bb, _LANE), jnp.float32)

    cost = pl.CostEstimate(
        flops=5 * B * n_elems,
        transcendentals=0,
        bytes_accessed=2 * B * n_elems * itemsize
        + 2 * n_bb * n_split * bb * _LANE * 4,
    )

    den_out, num_out = pl.pallas_call(
        kernel,
        out_shape=(out_sds, out_sds),
        grid_spec=pltpu.PrefetchScalarGridSpec(
            num_scalar_prefetch=0,
            grid=(n_bb, n_split, chunks_per_split),
            in_specs=[
                pl.BlockSpec((bb, chunk_rows, _LANE), in_map),
                pl.BlockSpec((bb, chunk_rows, _LANE), in_map),
            ],
            out_specs=(
                pl.BlockSpec((1, 1, bb, _LANE), out_map),
                pl.BlockSpec((1, 1, bb, _LANE), out_map),
            ),
        ),
        compiler_params=pltpu.CompilerParams(
            dimension_semantics=("parallel", "parallel", "arbitrary"),
            vmem_limit_bytes=_VMEM_LIMIT_BYTES,
        ),
        cost_estimate=cost,
    )(t, f)

    # Tiny finalization in JAX: combine the split halves, cross-lane reduce,
    # -2*num/den per batch, mean over config.batchs.
    den = den_out.sum(axis=1).reshape(n_bb * bb, _LANE)[:B].sum(axis=1)
    num = num_out.sum(axis=1).reshape(n_bb * bb, _LANE)[:B].sum(axis=1)
    iou = (-2.0 * num) / den
    return jnp.sum(iou) / jnp.float32(config.batchs)


def ios_loss_ref(true, false, config):
    """Pure-JAX reference matching the PyTorch module exactly."""
    denominator = jnp.sum(true, axis=(3, 2, 1)) + jnp.sum(false, axis=(3, 2, 1))
    numerator = -2.0 * jnp.sum(true * false, axis=(3, 2, 1))
    iou = numerator / denominator
    return jnp.sum(iou) / config.batchs


if __name__ == "__main__":
    key = jax.random.PRNGKey(0)
    k1, k2 = jax.random.split(key)

    B, C, H, W = 2, 4, 16, 16
    config = Config(batchs=B)

    # Positive values (probability/mask maps) so the denominator is nonzero.
    true = jax.random.uniform(k1, (B, C, H, W), dtype=jnp.float32)
    false = jax.random.uniform(k2, (B, C, H, W), dtype=jnp.float32)

    out = ios_loss(true, false, config)
    out = jax.block_until_ready(out)

    ref = ios_loss_ref(true, false, config)
    assert jnp.allclose(out, ref, rtol=1e-5, atol=1e-5), (out, ref)

    print("KERNEL_OK")
</pallas_src>

<mosaic_0001>
module attributes {stable_mosaic.version = 11 : i64} {
  func.func @kernel(%arg0: i32, %arg1: i32, %arg2: i32, %arg3: memref<2x8x128xf32, #tpu.memory_space<vmem>>, %arg4: memref<2x8x128xf32, #tpu.memory_space<vmem>>, %arg5: memref<1x1x2x128xf32, #tpu.memory_space<vmem>>, %arg6: memref<1x1x2x128xf32, #tpu.memory_space<vmem>>) attributes {dimension_semantics = [#tpu.dimension_semantics<parallel>, #tpu.dimension_semantics<parallel>, #tpu.dimension_semantics<arbitrary>], iteration_bounds = array<i64: 1, 1, 1>, scalar_prefetch = 0 : i64, scratch_operands = 0 : i64, tpu.core_type = #tpu.core_type<tc>, window_params = [{transform_indices = @transform_0, window_bounds = array<i64: 2, 8, 128>}, {transform_indices = @transform_1, window_bounds = array<i64: 2, 8, 128>}, {transform_indices = @transform_2, window_bounds = array<i64: 1, 1, 2, 128>}, {transform_indices = @transform_3, window_bounds = array<i64: 1, 1, 2, 128>}]} {
    %c0 = arith.constant 0 : index
    %c0_0 = arith.constant 0 : index
    %c0_1 = arith.constant 0 : index
    %0 = vector.load %arg3[%c0, %c0_0, %c0_1] : memref<2x8x128xf32, #tpu.memory_space<vmem>>, vector<2x8x128xf32>
    %c0_2 = arith.constant 0 : index
    %c0_3 = arith.constant 0 : index
    %c0_4 = arith.constant 0 : index
    %1 = vector.load %arg4[%c0_2, %c0_3, %c0_4] : memref<2x8x128xf32, #tpu.memory_space<vmem>>, vector<2x8x128xf32>
    %2 = arith.addf %0, %1 : vector<2x8x128xf32>
    %cst = arith.constant dense<0.000000e+00> : vector<2x128xf32>
    %3 = vector.multi_reduction <add>, %2, %cst [1] : vector<2x8x128xf32> to vector<2x128xf32>
    %4 = arith.mulf %0, %1 : vector<2x8x128xf32>
    %cst_5 = arith.constant dense<0.000000e+00> : vector<2x128xf32>
    %5 = vector.multi_reduction <add>, %4, %cst_5 [1] : vector<2x8x128xf32> to vector<2x128xf32>
    %c0_i32 = arith.constant 0 : i32
    %6 = arith.cmpi eq, %arg2, %c0_i32 : i32
    %7 = arith.extui %6 : i1 to i32
    %c0_i32_6 = arith.constant 0 : i32
    %8 = arith.cmpi ne, %7, %c0_i32_6 : i32
    scf.if %8 {
      %c0_9 = arith.constant 0 : index
      %c0_10 = arith.constant 0 : index
      %c0_11 = arith.constant 0 : index
      %c0_12 = arith.constant 0 : index
      %12 = vector.load %arg5[%c0_9, %c0_10, %c0_11, %c0_12] : memref<1x1x2x128xf32, #tpu.memory_space<vmem>>, vector<1x1x2x128xf32>
      %13 = vector.shape_cast %12 : vector<1x1x2x128xf32> to vector<2x128xf32>
      %14 = vector.shape_cast %3 : vector<2x128xf32> to vector<1x1x2x128xf32>
      tpu.vector_store %arg5[%c0_9, %c0_10, %c0_11, %c0_12], %14 {strides = array<i32>} : memref<1x1x2x128xf32, #tpu.memory_space<vmem>>, vector<1x1x2x128xf32>,
      %c0_13 = arith.constant 0 : index
      %c0_14 = arith.constant 0 : index
      %c0_15 = arith.constant 0 : index
      %c0_16 = arith.constant 0 : index
      %15 = vector.load %arg6[%c0_13, %c0_14, %c0_15, %c0_16] : memref<1x1x2x128xf32, #tpu.memory_space<vmem>>, vector<1x1x2x128xf32>
      %16 = vector.shape_cast %15 : vector<1x1x2x128xf32> to vector<2x128xf32>
      %17 = vector.shape_cast %5 : vector<2x128xf32> to vector<1x1x2x128xf32>
      tpu.vector_store %arg6[%c0_13, %c0_14, %c0_15, %c0_16], %17 {strides = array<i32>} : memref<1x1x2x128xf32, #tpu.memory_space<vmem>>, vector<1x1x2x128xf32>,
    } else {
    }
    %c0_i32_7 = arith.constant 0 : i32
    %9 = arith.cmpi sgt, %arg2, %c0_i32_7 : i32
    %10 = arith.extui %9 : i1 to i32
    %c0_i32_8 = arith.constant 0 : i32
    %11 = arith.cmpi ne, %10, %c0_i32_8 : i32
    scf.if %11 {
      %c0_9 = arith.constant 0 : index
      %c0_10 = arith.constant 0 : index
      %c0_11 = arith.constant 0 : index
      %c0_12 = arith.constant 0 : index
      %12 = vector.load %arg5[%c0_9, %c0_10, %c0_11, %c0_12] : memref<1x1x2x128xf32, #tpu.memory_space<vmem>>, vector<1x1x2x128xf32>
      %13 = vector.shape_cast %12 : vector<1x1x2x128xf32> to vector<2x128xf32>
      %14 = arith.addf %13, %3 : vector<2x128xf32>
      %c0_13 = arith.constant 0 : index
      %c0_14 = arith.constant 0 : index
      %c0_15 = arith.constant 0 : index
      %c0_16 = arith.constant 0 : index
      %15 = vector.load %arg5[%c0_13, %c0_14, %c0_15, %c0_16] : memref<1x1x2x128xf32, #tpu.memory_space<vmem>>, vector<1x1x2x128xf32>
      %16 = vector.shape_cast %15 : vector<1x1x2x128xf32> to vector<2x128xf32>
      %17 = vector.shape_cast %14 : vector<2x128xf32> to vector<1x1x2x128xf32>
      tpu.vector_store %arg5[%c0_13, %c0_14, %c0_15, %c0_16], %17 {strides = array<i32>} : memref<1x1x2x128xf32, #tpu.memory_space<vmem>>, vector<1x1x2x128xf32>,
      %c0_17 = arith.constant 0 : index
      %c0_18 = arith.constant 0 : index
      %c0_19 = arith.constant 0 : index
      %c0_20 = arith.constant 0 : index
      %18 = vector.load %arg6[%c0_17, %c0_18, %c0_19, %c0_20] : memref<1x1x2x128xf32, #tpu.memory_space<vmem>>, vector<1x1x2x128xf32>
      %19 = vector.shape_cast %18 : vector<1x1x2x128xf32> to vector<2x128xf32>
      %20 = arith.addf %19, %5 : vector<2x128xf32>
      %c0_21 = arith.constant 0 : index
      %c0_22 = arith.constant 0 : index
      %c0_23 = arith.constant 0 : index
      %c0_24 = arith.constant 0 : index
      %21 = vector.load %arg6[%c0_21, %c0_22, %c0_23, %c0_24] : memref<1x1x2x128xf32, #tpu.memory_space<vmem>>, vector<1x1x2x128xf32>
      %22 = vector.shape_cast %21 : vector<1x1x2x128xf32> to vector<2x128xf32>
      %23 = vector.shape_cast %20 : vector<2x128xf32> to vector<1x1x2x128xf32>
      tpu.vector_store %arg6[%c0_21, %c0_22, %c0_23, %c0_24], %23 {strides = array<i32>} : memref<1x1x2x128xf32, #tpu.memory_space<vmem>>, vector<1x1x2x128xf32>,
    } else {
    }
    return
  }
  func.func @transform_0(%arg0: i32, %arg1: i32, %arg2: i32) -> (i32, i32, i32) {
    %c1_i32 = arith.constant 1 : i32
    %0 = arith.muli %arg1, %c1_i32 : i32
    %1 = arith.addi %0, %arg2 : i32
    %c0_i32 = arith.constant 0 : i32
    %2 = arith.minsi %1, %c0_i32 : i32
    %c0_i32_0 = arith.constant 0 : i32
    %c0_i32_1 = arith.constant 0 : i32
    return %arg0, %2, %c0_i32_0 : i32, i32, i32
  }
  func.func @transform_1(%arg0: i32, %arg1: i32, %arg2: i32) -> (i32, i32, i32) {
    %c1_i32 = arith.constant 1 : i32
    %0 = arith.muli %arg1, %c1_i32 : i32
    %1 = arith.addi %0, %arg2 : i32
    %c0_i32 = arith.constant 0 : i32
    %2 = arith.minsi %1, %c0_i32 : i32
    %c0_i32_0 = arith.constant 0 : i32
    %c0_i32_1 = arith.constant 0 : i32
    return %arg0, %2, %c0_i32_0 : i32, i32, i32
  }
  func.func @transform_2(%arg0: i32, %arg1: i32, %arg2: i32) -> (i32, i32, i32, i32) {
    %c0_i32 = arith.constant 0 : i32
    %c0_i32_0 = arith.constant 0 : i32
    %c0_i32_1 = arith.constant 0 : i32
    return %arg0, %arg1, %c0_i32, %c0_i32_0 : i32, i32, i32, i32
  }
  func.func @transform_3(%arg0: i32, %arg1: i32, %arg2: i32) -> (i32, i32, i32, i32) {
    %c0_i32 = arith.constant 0 : i32
    %c0_i32_0 = arith.constant 0 : i32
    %c0_i32_1 = arith.constant 0 : i32
    return %arg0, %arg1, %c0_i32, %c0_i32_0 : i32, i32, i32, i32
  }
}

</mosaic_0001>

<llo_original>
// kernel: tpu_custom_call.1
$region0: #{tpu_custom_call.1}
  #allocation0 [shape = 'u32[]', space=smem, size = 0x4, offset = 0x4, fixed_abs, tag = 'smem constant byte address 0x4 - core index']
  #allocation1 [shape = 'u32[144,128]{1,0:T(1,128)}', space=vmem, size = 0x12000, scoped, tag = 'internal scratch']
  %s0 = inlined_call_operand.hbm [shape: f32[2,8,128], index: 0, kind: input, shape index: {}]
  %s1 = inlined_call_operand.hbm [shape: f32[2,8,128], index: 1, kind: input, shape index: {}]
  %s2 = inlined_call_operand.hbm [shape: f32[1,1,2,128], index: 2, kind: output, shape index: {0}]
  %s3 = inlined_call_operand.hbm [shape: f32[1,1,2,128], index: 3, kind: output, shape index: {1}]
  %4 = xla_tuple %s2, %s3
  %s5 = sld [smem:[#allocation0]]
  $region42: #{tpu_custom_call.1} parent=0
    _
  %s7 = ssub.s32 1, %s5
  %s8 = scalar_select 0, %s7, %s5
  $region1: #{tpu_custom_call.1} parent=0
    #allocation2 [shape = 'u8[8192]{0}', space=vmem, size = 0x2000, scoped, tag = 'input window, operand 0, single buffered']
    #allocation3 [shape = 's32[1]{0}', space=sflag, size = 0x4, scoped, tag = 'scoped memory for tpu_custom_call.1']
    #allocation4 [shape = 's32[1]{0}', space=sflag, size = 0x4, scoped, tag = 'scoped memory for tpu_custom_call.1']
    #allocation5 [shape = 'u8[8192]{0}', space=vmem, size = 0x2000, scoped, tag = 'input window, operand 1, single buffered']
    #allocation6 [shape = 's32[1]{0}', space=sflag, size = 0x4, scoped, tag = 'scoped memory for tpu_custom_call.1']
    #allocation7 [shape = 'u8[1024]{0}', space=vmem, size = 0x400, scoped, tag = 'output window, operand 0, single buffered']
    #allocation8 [shape = 'u8[1024]{0}', space=vmem, size = 0x400, scoped, tag = 'output window, operand 1, single buffered']
    #allocation9 [shape = 's32[1]{0}', space=sflag, size = 0x4, scoped, tag = 'scoped memory for tpu_custom_call.1']
    %9 = vsyncpa [#allocation3], 0
    %10 = vsyncpa [#allocation6], 0
    %11 = vsyncpa [#allocation4], 0
    %12 = vsyncpa [#allocation9], 0
    // Predicated region
    $region2: #{tpu_custom_call.1} parent=1 // pred_check
      _
    $region3: #{tpu_custom_call.1} parent=1 // pred_check_branch
      %14 = sbr.rel (0) target = $region5
    $region4: #{tpu_custom_call.1} parent=1 // pred_region
      %s15 = sadd.s32 0, 0
      %p16 = scmp.lt.s32.totalorder %s15, 0
      %s17 = scalar_select %p16, %s15, 0
      %s19 = ssub.s32 256, 256
      %20 = vsyncadd [#allocation3], %s19
      %s21 = smul.addr %s17, 128
      %s22 = scalar_lea.hbm %s0, %s21
      %s23 = sshll.u32 [#allocation2], 4
      %s24 = int_to_ptr.vmem [resolvable:$true] %s23
      %29 = dma.hbm_to_vmem [thread:$0]  %s22, 256, %s24, [#allocation3], 128, 128, 8
    $region5: #{tpu_custom_call.1} parent=1 // pred_fallthru
      _
    // Predicated region
    $region6: #{tpu_custom_call.1} parent=1 // pred_check
      _
    $region7: #{tpu_custom_call.1} parent=1 // pred_check_branch
      %31 = sbr.rel (0) target = $region9
    $region8: #{tpu_custom_call.1} parent=1 // pred_region
      %s32 = sadd.s32 0, 0
      %p33 = scmp.lt.s32.totalorder %s32, 0
      %s34 = scalar_select %p33, %s32, 0
      %s36 = ssub.s32 256, 256
      %37 = vsyncadd [#allocation6], %s36
      %s38 = smul.addr %s34, 128
      %s39 = scalar_lea.hbm %s1, %s38
      %s40 = sshll.u32 [#allocation5], 4
      %s41 = int_to_ptr.vmem [resolvable:$true] %s40
      %46 = dma.hbm_to_vmem [thread:$0]  %s39, 256, %s41, [#allocation6], 128, 128, 8
    $region9: #{tpu_custom_call.1} parent=1 // pred_fallthru
      _
    // Predicated region
    $region10: #{tpu_custom_call.1} parent=1 // pred_check
      _
    $region11: #{tpu_custom_call.1} parent=1 // pred_check_branch
      %48 = sbr.rel (0) target = $region13
    $region12: #{tpu_custom_call.1} parent=1 // pred_region
      %49 = dma.done [#allocation3], 256
    $region13: #{tpu_custom_call.1} parent=1 // pred_fallthru
      _
    // Predicated region
    $region14: #{tpu_custom_call.1} parent=1 // pred_check
      _
    $region15: #{tpu_custom_call.1} parent=1 // pred_check_branch
      %51 = sbr.rel (0) target = $region17
    $region16: #{tpu_custom_call.1} parent=1 // pred_region
      %52 = dma.done [#allocation6], 256
    $region17: #{tpu_custom_call.1} parent=1 // pred_fallthru
      _
    %s53 = sadd.s32 0, 0
    %p54 = scmp.lt.s32.totalorder %s53, 0
    %s55 = scalar_select %p54, %s53, 0
    %s56 = sadd.s32 0, 0
    %p57 = scmp.lt.s32.totalorder %s56, 0
    %s58 = scalar_select %p57, %s56, 0
    %v59 = vld [vmem:[#allocation2] sm:$0xff]
    %v60 = vld [vmem:[#allocation2 + $0x8] sm:$0xff]
    %v61 = vld [vmem:[#allocation5] sm:$0xff]
    %v62 = vld [vmem:[#allocation5 + $0x8] sm:$0xff]
    %v63 = vadd.f32 %v59, %v61
    %v64 = vadd.f32 %v60, %v62
    %v65 = vrot.slane %v63, 4
    %v66 = vadd.f32 %v63, %v65
    %v67 = vrot.slane %v66, 2
    %v68 = vadd.f32 %v66, %v67
    %v69 = vrot.slane %v68, 1
    %v70 = vadd.f32 %v68, %v69
    %v71 = vrot.slane %v64, 4
    %v72 = vadd.f32 %v64, %v71
    %v73 = vrot.slane %v72, 2
    %v74 = vadd.f32 %v72, %v73
    %v75 = vrot.slane %v74, 1
    %v76 = vadd.f32 %v74, %v75
    %v77 = vmul.f32 %v59, %v61
    %v78 = vmul.f32 %v60, %v62
    %v79 = vrot.slane %v77, 4
    %v80 = vadd.f32 %v77, %v79
    %v81 = vrot.slane %v80, 2
    %v82 = vadd.f32 %v80, %v81
    %v83 = vrot.slane %v82, 1
    %v84 = vadd.f32 %v82, %v83
    %v85 = vrot.slane %v78, 4
    %v86 = vadd.f32 %v78, %v85
    %v87 = vrot.slane %v86, 2
    %v88 = vadd.f32 %v86, %v87
    %v89 = vrot.slane %v88, 1
    %v90 = vadd.f32 %v88, %v89
    %p91 = scmp.eq.s32.totalorder 0, 0
    // Predicated region
    $region18: #{tpu_custom_call.1} parent=1 // pred_check
      %p92 = pneg %p91
    $region19: #{tpu_custom_call.1} parent=1 // pred_check_branch
      %94 = sbr.rel (%p92) target = $region21
    $region20: #{tpu_custom_call.1} parent=1 // pred_region
      %vm97 = vcmask 1041409
      %v98 = vsel %vm97, %v76, %v70
      %100 = vst [vmem:[#allocation7] sm:$0x3] %v98
      %v103 = vsel %vm97, %v90, %v84
      %105 = vst [vmem:[#allocation8] sm:$0x3] %v103
    $region21: #{tpu_custom_call.1} parent=1 // pred_fallthru
      _
    %p106 = scmp.gt.s32.totalorder 0, 0
    // Predicated region
    $region22: #{tpu_custom_call.1} parent=1 // pred_check
      %p107 = pneg %p106
    $region23: #{tpu_custom_call.1} parent=1 // pred_check_branch
      %109 = sbr.rel (%p107) target = $region25
    $region24: #{tpu_custom_call.1} parent=1 // pred_region
      %v110 = vld [vmem:[#allocation7] sm:$0x3]
      %vm113 = vcmask 1041409
      %v114 = vsel %vm113, %v76, %v70
      %v116 = vadd.f32 %v110, %v114
      %117 = vst [vmem:[#allocation7] sm:$0x3] %v116
      %v118 = vld [vmem:[#allocation8] sm:$0x3]
      %v121 = vsel %vm113, %v90, %v84
      %v123 = vadd.f32 %v118, %v121
      %124 = vst [vmem:[#allocation8] sm:$0x3] %v123
    $region25: #{tpu_custom_call.1} parent=1 // pred_fallthru
      _
    // Predicated region
    $region26: #{tpu_custom_call.1} parent=1 // pred_check
      _
    $region27: #{tpu_custom_call.1} parent=1 // pred_check_branch
      %126 = sbr.rel (0) target = $region29
    $region28: #{tpu_custom_call.1} parent=1 // pred_region
      %s128 = ssub.s32 32, 32
      %129 = vsyncadd [#allocation4], %s128
      %s131 = sshll.u32 [#allocation7], 4
      %s132 = int_to_ptr.vmem [resolvable:$true] %s131
      %134 = dma.vmem_to_hbm [thread:$0]  %s132, 32, %s2, [#allocation4]
    $region29: #{tpu_custom_call.1} parent=1 // pred_fallthru
      _
    // Predicated region
    $region30: #{tpu_custom_call.1} parent=1 // pred_check
      _
    $region31: #{tpu_custom_call.1} parent=1 // pred_check_branch
      %136 = sbr.rel (0) target = $region33
    $region32: #{tpu_custom_call.1} parent=1 // pred_region
      %s138 = ssub.s32 32, 32
      %139 = vsyncadd [#allocation9], %s138
      %s141 = sshll.u32 [#allocation8], 4
      %s142 = int_to_ptr.vmem [resolvable:$true] %s141
      %144 = dma.vmem_to_hbm [thread:$0]  %s142, 32, %s3, [#allocation9]
    $region33: #{tpu_custom_call.1} parent=1 // pred_fallthru
      _
    // Predicated region
    $region34: #{tpu_custom_call.1} parent=1 // pred_check
      _
    $region35: #{tpu_custom_call.1} parent=1 // pred_check_branch
      %146 = sbr.rel (0) target = $region37
    $region36: #{tpu_custom_call.1} parent=1 // pred_region
      %147 = dma.done [#allocation4], 32
    $region37: #{tpu_custom_call.1} parent=1 // pred_fallthru
      _
    // Predicated region
    $region38: #{tpu_custom_call.1} parent=1 // pred_check
      _
    $region39: #{tpu_custom_call.1} parent=1 // pred_check_branch
      %149 = sbr.rel (0) target = $region41
    $region40: #{tpu_custom_call.1} parent=1 // pred_region
      %150 = dma.done [#allocation9], 32
    $region41: #{tpu_custom_call.1} parent=1 // pred_fallthru
      _
    %151 = vsyncpa [#allocation3], 1
    %152 = vsyncpa [#allocation6], 1
    %153 = vsyncpa [#allocation4], 1
    %154 = vsyncpa [#allocation9], 1

</llo_original>
